<compile_context>
chip_gen: v5e
topology: v5e:2x2
jax: 0.10.0
libtpu: 0.0.40
codegen_flags: <defaults>
</compile_context>

<pallas_src>
import jax
import jax.numpy as jnp
from jax.experimental import pallas as pl
from jax.experimental.pallas import tpu as pltpu


def _round_up(n: int, m: int) -> int:
    return ((n + m - 1) // m) * m


def _choose_block_b(batch: int, in_dim: int, hidden_dim: int, out_dim: int) -> int:
    """Batch-tile rows per grid step.

    Prefer 512 (measured ~85% of HBM roofline for f32 tiles); shrink if the
    double-buffered x/out tiles plus f32 activations would crowd VMEM
    (budget kept far under the v7x 32 MiB scoped default / 64 MiB physical).
    """
    tb = 512

    def vmem_bytes(t):
        io = 2 * 2 * t * (in_dim + out_dim) * 4   # double-buffered in/out tiles (f32 bound)
        act = 3 * t * hidden_dim * 4              # in-kernel activation temporaries
        return io + act

    while tb > 8 and vmem_bytes(tb) > (8 << 20):
        tb //= 2
    return tb


def _make_kernel(reduce_fc3: bool):
    def kernel(x_ref, w1_ref, b1_ref, w2_ref, b2_ref, w3_ref, b3_ref, o_ref):
        # fc1 + ReLU  (bf16 MXU operands, f32 accumulation)
        w1 = w1_ref[...]
        h = jnp.dot(x_ref[...].astype(w1.dtype), w1,
                    preferred_element_type=jnp.float32)
        h = jnp.maximum(h + b1_ref[...], 0.0)

        # fc2 + ReLU
        w2 = w2_ref[...]
        h = jnp.dot(h.astype(w2.dtype), w2,
                    preferred_element_type=jnp.float32)
        h = jnp.maximum(h + b2_ref[...], 0.0)

        # fc3 (no activation)
        if reduce_fc3:
            # out_dim == 1: w3_ref is a lane-dense (1, hidden) f32 row.
            # VPU multiply + XLU lane-reduce avoids a 1-column MXU matmul.
            y = jnp.sum(h * w3_ref[...], axis=-1, keepdims=True)
        else:
            w3 = w3_ref[...]
            y = jnp.dot(h.astype(w3.dtype), w3,
                        preferred_element_type=jnp.float32)
        o_ref[...] = (y + b3_ref[...]).astype(o_ref.dtype)

    return kernel


def sac_critic_forward(x, params, *, compute_dtype=jnp.bfloat16, block_b=None):
    """x: (B, input_dim) float32.  params: dict of w1,b1,w2,b2,w3,b3."""
    w1, b1 = params["w1"], params["b1"]
    w2, b2 = params["w2"], params["b2"]
    w3, b3 = params["w3"], params["b3"]

    batch, in_dim = x.shape
    hidden_dim = w1.shape[1]
    out_dim = w3.shape[1]
    reduce_fc3 = (out_dim == 1)

    if block_b is None:
        block_b = _choose_block_b(batch, in_dim, hidden_dim, out_dim)
    # Sublane alignment + never tile wider than the (padded) batch.
    block_b = max(8, _round_up(min(block_b, _round_up(batch, 8)), 8))

    b_pad = _round_up(batch, block_b)
    x_in = jnp.pad(x, ((0, b_pad - batch), (0, 0))) if b_pad != batch else x
    grid_b = pl.cdiv(b_pad, block_b)

    # MXU operands in compute_dtype (bf16 by default), f32 everywhere else.
    w1c = w1.astype(compute_dtype)
    w2c = w2.astype(compute_dtype)
    if reduce_fc3:
        w3c = w3.T.astype(jnp.float32)        # (1, hidden) row for the VPU reduce
    else:
        w3c = w3.astype(compute_dtype)
    # NOTE: both SAC Q-heads can be fused by concatenating their w3/b3 along the
    # output dim (out_dim > 1 path) to amortize the per-call overhead.

    def const_spec(a):
        return pl.BlockSpec(a.shape, lambda i: (0,) * a.ndim)

    out = pl.pallas_call(
        _make_kernel(reduce_fc3),
        out_shape=jax.ShapeDtypeStruct((b_pad, out_dim), jnp.float32),
        grid=(grid_b,),
        in_specs=[
            pl.BlockSpec((block_b, in_dim), lambda i: (i, 0)),  # batch-tiled x
            const_spec(w1c), const_spec(b1),
            const_spec(w2c), const_spec(b2),
            const_spec(w3c), const_spec(b3),
        ],
        out_specs=pl.BlockSpec((block_b, out_dim), lambda i: (i, 0)),
        compiler_params=pltpu.CompilerParams(
            dimension_semantics=("parallel",),
        ),
    )(x_in, w1c, b1, w2c, b2, w3c, b3)

    return out[:batch] if b_pad != batch else out


def init_params(key, input_dim, hidden_dim, output_dim):
    """Deterministic init mimicking nn.Linear default (uniform +/- 1/sqrt(fan_in))."""
    ks = jax.random.split(key, 6)

    def linear(kw, kb, fan_in, fan_out):
        bound = 1.0 / jnp.sqrt(jnp.float32(fan_in))
        w = jax.random.uniform(kw, (fan_in, fan_out), jnp.float32, -bound, bound)
        b = jax.random.uniform(kb, (1, fan_out), jnp.float32, -bound, bound)
        return w, b

    w1, b1 = linear(ks[0], ks[1], input_dim, hidden_dim)
    w2, b2 = linear(ks[2], ks[3], hidden_dim, hidden_dim)
    w3, b3 = linear(ks[4], ks[5], hidden_dim, output_dim)
    return dict(w1=w1, b1=b1, w2=w2, b2=b2, w3=w3, b3=b3)


def reference_forward(x, p):
    h = jnp.maximum(x @ p["w1"] + p["b1"], 0.0)
    h = jnp.maximum(h @ p["w2"] + p["b2"], 0.0)
    return h @ p["w3"] + p["b3"]


if __name__ == "__main__":
    # Small shapes consistent with SACCritic(input_dim, hidden_dim, output_dim).
    # batch=48 with block_b=32 exercises a 2-step pipelined grid + batch padding.
    batch, input_dim, hidden_dim, output_dim = 48, 16, 32, 1

    key = jax.random.PRNGKey(0)
    kx, kp = jax.random.split(key)
    x = jax.random.normal(kx, (batch, input_dim), jnp.float32)
    params = init_params(kp, input_dim, hidden_dim, output_dim)

    ref = reference_forward(x, params)

    # Exact f32 path: tight tolerance.
    out_f32 = jax.block_until_ready(
        sac_critic_forward(x, params, compute_dtype=jnp.float32, block_b=32))
    assert out_f32.shape == (batch, output_dim)
    assert jnp.allclose(out_f32, ref, atol=1e-5, rtol=1e-5), "f32 mismatch vs reference"

    # Default bf16-MXU path (f32 accumulation): relaxed tolerance.
    out_bf16 = jax.block_until_ready(
        sac_critic_forward(x, params, block_b=32))
    assert out_bf16.shape == (batch, output_dim)
    assert jnp.allclose(out_bf16, ref, atol=5e-2, rtol=5e-2), "bf16 mismatch vs reference"

    print("KERNEL_OK")
</pallas_src>

<mosaic_0001>
module attributes {stable_mosaic.version = 11 : i64} {
  func.func @kernel(%arg0: i32, %arg1: memref<32x16xf32, #tpu.memory_space<vmem>>, %arg2: memref<16x32xf32, #tpu.memory_space<vmem>>, %arg3: memref<1x32xf32, #tpu.memory_space<vmem>>, %arg4: memref<32x32xf32, #tpu.memory_space<vmem>>, %arg5: memref<1x32xf32, #tpu.memory_space<vmem>>, %arg6: memref<1x32xf32, #tpu.memory_space<vmem>>, %arg7: memref<1x1xf32, #tpu.memory_space<vmem>>, %arg8: memref<32x1xf32, #tpu.memory_space<vmem>>) attributes {dimension_semantics = [#tpu.dimension_semantics<parallel>], iteration_bounds = array<i64: 2>, scalar_prefetch = 0 : i64, scratch_operands = 0 : i64, tpu.core_type = #tpu.core_type<tc>, window_params = [{transform_indices = @transform_0, window_bounds = array<i64: 32, 16>}, {pipeline_mode = #tpu.pipeline_mode<synchronous>, transform_indices = @transform_1, window_bounds = array<i64: 16, 32>}, {pipeline_mode = #tpu.pipeline_mode<synchronous>, transform_indices = @transform_2, window_bounds = array<i64: 1, 32>}, {pipeline_mode = #tpu.pipeline_mode<synchronous>, transform_indices = @transform_3, window_bounds = array<i64: 32, 32>}, {pipeline_mode = #tpu.pipeline_mode<synchronous>, transform_indices = @transform_4, window_bounds = array<i64: 1, 32>}, {pipeline_mode = #tpu.pipeline_mode<synchronous>, transform_indices = @transform_5, window_bounds = array<i64: 1, 32>}, {pipeline_mode = #tpu.pipeline_mode<synchronous>, transform_indices = @transform_6, window_bounds = array<i64: 1, 1>}, {transform_indices = @transform_7, window_bounds = array<i64: 32, 1>}]} {
    %c0 = arith.constant 0 : index
    %c0_0 = arith.constant 0 : index
    %0 = vector.load %arg2[%c0, %c0_0] : memref<16x32xf32, #tpu.memory_space<vmem>>, vector<16x32xf32>
    %c0_1 = arith.constant 0 : index
    %c0_2 = arith.constant 0 : index
    %1 = vector.load %arg1[%c0_1, %c0_2] : memref<32x16xf32, #tpu.memory_space<vmem>>, vector<32x16xf32>
    %cst = arith.constant dense<0.000000e+00> : vector<32x32xf32>
    %2 = tpu.matmul %1, %0, %cst {dimension_numbers = #tpu.dot_dimension_numbers<[1], [0], [0], [1], [0, 0, 1, 1], [], []>} : vector<32x16xf32>, vector<16x32xf32>, vector<32x32xf32> -> vector<32x32xf32>
    %c0_3 = arith.constant 0 : index
    %c0_4 = arith.constant 0 : index
    %3 = vector.load %arg3[%c0_3, %c0_4] : memref<1x32xf32, #tpu.memory_space<vmem>>, vector<1x32xf32>
    %4 = vector.broadcast %3 : vector<1x32xf32> to vector<32x32xf32>
    %5 = arith.addf %2, %4 : vector<32x32xf32>
    %cst_5 = arith.constant 0.000000e+00 : f32
    %6 = vector.broadcast %cst_5 : f32 to vector<32x32xf32>
    %7 = arith.maximumf %5, %6 : vector<32x32xf32>
    %c0_6 = arith.constant 0 : index
    %c0_7 = arith.constant 0 : index
    %8 = vector.load %arg4[%c0_6, %c0_7] : memref<32x32xf32, #tpu.memory_space<vmem>>, vector<32x32xf32>
    %cst_8 = arith.constant dense<0.000000e+00> : vector<32x32xf32>
    %9 = tpu.matmul %7, %8, %cst_8 {dimension_numbers = #tpu.dot_dimension_numbers<[1], [0], [0], [1], [0, 0, 1, 1], [], []>} : vector<32x32xf32>, vector<32x32xf32>, vector<32x32xf32> -> vector<32x32xf32>
    %c0_9 = arith.constant 0 : index
    %c0_10 = arith.constant 0 : index
    %10 = vector.load %arg5[%c0_9, %c0_10] : memref<1x32xf32, #tpu.memory_space<vmem>>, vector<1x32xf32>
    %11 = vector.broadcast %10 : vector<1x32xf32> to vector<32x32xf32>
    %12 = arith.addf %9, %11 : vector<32x32xf32>
    %cst_11 = arith.constant 0.000000e+00 : f32
    %13 = vector.broadcast %cst_11 : f32 to vector<32x32xf32>
    %14 = arith.maximumf %12, %13 : vector<32x32xf32>
    %c0_12 = arith.constant 0 : index
    %c0_13 = arith.constant 0 : index
    %15 = vector.load %arg6[%c0_12, %c0_13] : memref<1x32xf32, #tpu.memory_space<vmem>>, vector<1x32xf32>
    %16 = vector.broadcast %15 : vector<1x32xf32> to vector<32x32xf32>
    %17 = arith.mulf %14, %16 : vector<32x32xf32>
    %cst_14 = arith.constant dense<0.000000e+00> : vector<32xf32>
    %18 = vector.multi_reduction <add>, %17, %cst_14 [1] : vector<32x32xf32> to vector<32xf32>
    %19 = vector.shape_cast %18 : vector<32xf32> to vector<32x1xf32>
    %c0_15 = arith.constant 0 : index
    %c0_16 = arith.constant 0 : index
    %20 = vector.load %arg7[%c0_15, %c0_16] : memref<1x1xf32, #tpu.memory_space<vmem>>, vector<1x1xf32>
    %21 = vector.broadcast %20 : vector<1x1xf32> to vector<32x1xf32>
    %22 = arith.addf %19, %21 : vector<32x1xf32>
    %c0_17 = arith.constant 0 : index
    %c0_18 = arith.constant 0 : index
    %23 = vector.load %arg8[%c0_17, %c0_18] : memref<32x1xf32, #tpu.memory_space<vmem>>, vector<32x1xf32>
    tpu.vector_store %arg8[%c0_17, %c0_18], %22 {strides = array<i32>} : memref<32x1xf32, #tpu.memory_space<vmem>>, vector<32x1xf32>,
    return
  }
  func.func @transform_0(%arg0: i32) -> (i32, i32) {
    %c0_i32 = arith.constant 0 : i32
    %c0_i32_0 = arith.constant 0 : i32
    return %arg0, %c0_i32 : i32, i32
  }
  func.func @transform_1(%arg0: i32) -> (i32, i32) {
    %c0_i32 = arith.constant 0 : i32
    %c0_i32_0 = arith.constant 0 : i32
    %c0_i32_1 = arith.constant 0 : i32
    return %c0_i32, %c0_i32_0 : i32, i32
  }
  func.func @transform_2(%arg0: i32) -> (i32, i32) {
    %c0_i32 = arith.constant 0 : i32
    %c0_i32_0 = arith.constant 0 : i32
    %c0_i32_1 = arith.constant 0 : i32
    return %c0_i32, %c0_i32_0 : i32, i32
  }
  func.func @transform_3(%arg0: i32) -> (i32, i32) {
    %c0_i32 = arith.constant 0 : i32
    %c0_i32_0 = arith.constant 0 : i32
    %c0_i32_1 = arith.constant 0 : i32
    return %c0_i32, %c0_i32_0 : i32, i32
  }
  func.func @transform_4(%arg0: i32) -> (i32, i32) {
    %c0_i32 = arith.constant 0 : i32
    %c0_i32_0 = arith.constant 0 : i32
    %c0_i32_1 = arith.constant 0 : i32
    return %c0_i32, %c0_i32_0 : i32, i32
  }
  func.func @transform_5(%arg0: i32) -> (i32, i32) {
    %c0_i32 = arith.constant 0 : i32
    %c0_i32_0 = arith.constant 0 : i32
    %c0_i32_1 = arith.constant 0 : i32
    return %c0_i32, %c0_i32_0 : i32, i32
  }
  func.func @transform_6(%arg0: i32) -> (i32, i32) {
    %c0_i32 = arith.constant 0 : i32
    %c0_i32_0 = arith.constant 0 : i32
    %c0_i32_1 = arith.constant 0 : i32
    return %c0_i32, %c0_i32_0 : i32, i32
  }
  func.func @transform_7(%arg0: i32) -> (i32, i32) {
    %c0_i32 = arith.constant 0 : i32
    %c0_i32_0 = arith.constant 0 : i32
    return %arg0, %c0_i32 : i32, i32
  }
}

</mosaic_0001>

<llo_original>
// kernel: tpu_custom_call.1
$region0: #{tpu_custom_call.1}
  #allocation0 [shape = 'u32[]', space=smem, size = 0x4, offset = 0x4, fixed_abs, tag = 'smem constant byte address 0x4 - core index']
  #allocation1 [shape = 'u32[72,128]{1,0:T(1,128)}', space=vmem, size = 0x9000, scoped, tag = 'internal scratch']
  #allocation2 [shape = 'f32[1,1]{1,0:T(1,128)S(1)}', space=vmem, size = 0x200, scoped, tag = 'scoped memory for tpu_custom_call.1']
  %s0 = inlined_call_operand.vmem [shape: f32[64,16], index: 0, kind: input, shape index: {}]
  %s1 = inlined_call_operand.vmem [shape: f32[16,32], index: 1, kind: input, shape index: {}]
  %s2 = inlined_call_operand.vmem [shape: f32[1,32], index: 2, kind: input, shape index: {}]
  %s3 = inlined_call_operand.vmem [shape: f32[32,32], index: 3, kind: input, shape index: {}]
  %s4 = inlined_call_operand.vmem [shape: f32[1,32], index: 4, kind: input, shape index: {}]
  %s5 = inlined_call_operand.vmem [shape: f32[1,32], index: 5, kind: input, shape index: {}]
  %s6 = inlined_call_operand.<no memory space> [shape: f32[1,1], index: 6, kind: input, shape index: {}]
  %s7 = inlined_call_operand.vmem [shape: f32[64,1], index: 7, kind: output, shape index: {}]
  %s8 = sld [smem:[#allocation0]]
  $region61: #{tpu_custom_call.1} parent=0
    _
  %s10 = ssub.s32 1, %s8
  %s11 = scalar_select 0, %s10, %s8
  %v12 = vstv %s6
  %13 = vst [vmem:[#allocation2] sm:$0x1] %v12
  loop: start=0, step=1, limit=4
  $region2: #{tpu_custom_call.1} parent=0 // loop_pre_header
    _
  $region3: #{tpu_custom_call.1} parent=0 // loop_header
    %s15 = sphi 0, %s19
    %p16 = scmp.ge.s32.totalorder %s15, 4
    %s25 = sphi 0, %s27
    %s28 = sphi 0, %s25
    %s29 = sphi 0, %s28
    %s45 = sphi 0, %s29
    %s49 = sphi 0, %s49
    %s51 = sphi 0, %s49
    %s52 = sphi 0, %s51
    %s66 = sphi 0, %s52
    %s70 = sphi 0, %s70
    %s72 = sphi 0, %s70
    %s73 = sphi 0, %s72
    %s87 = sphi 0, %s73
    %s91 = sphi 0, %s91
    %s93 = sphi 0, %s91
    %s94 = sphi 0, %s93
    %s108 = sphi 0, %s94
    %s112 = sphi 0, %s112
    %s114 = sphi 0, %s112
    %s115 = sphi 0, %s114
    %s129 = sphi 0, %s115
    %s133 = sphi 0, %s133
    %s135 = sphi 0, %s133
    %s136 = sphi 0, %s135
    %s150 = sphi 0, %s136
    %s154 = sphi 0, %s154
    %s156 = sphi 0, %s154
    %s157 = sphi 0, %s156
    %s171 = sphi 0, %s157
    %s177 = sphi 0, %s179
    %s180 = sphi 0, %s177
    %s181 = sphi 0, %s180
    %s197 = sphi 0, %s181
  $region4: #{tpu_custom_call.1} parent=0 // loop_header_branch
    %18 = sbr.rel (%p16) target = $region8
  $region5: #{tpu_custom_call.1} parent=0 // loop_body
    %s20 = ssub.s32 %s15, 1
    %s21 = ssub.s32 %s15, 2
    %s22 = sadd.s32 %s15, 1
    %s23 = ssub.s32 %s15, %s22
    %p24 = scmp.eq.s32.totalorder %s23, 0
    %s26 = sadd.s32 %s25, 1
    %s27 = scalar_select %p24, %s25, %s26
    %p30 = pneg %p24
    %p31 = scmp.eq.s32.totalorder %s15, 1
    %p32 = por %p30, %p31
    %p33 = scmp.ne.s32.totalorder %s25, %s28
    %p34 = scmp.eq.s32.totalorder %s15, 0
    %p35 = por %p33, %p34
    %p36 = scmp.ne.s32.totalorder %s25, %s28
    %p37 = scmp.eq.s32.totalorder %s20, 1
    %p38 = por %p36, %p37
    %p39 = scmp.ne.s32.totalorder %s28, %s29
    %p40 = scmp.eq.s32.totalorder %s20, 0
    %p41 = por %p39, %p40
    %p42 = scmp.ne.s32.totalorder %s28, %s29
    %p43 = scmp.eq.s32.totalorder %s21, 1
    %p44 = por %p42, %p43
    %p46 = scmp.ne.s32.totalorder %s29, %s45
    %p47 = scmp.eq.s32.totalorder %s21, 0
    %p48 = por %p46, %p47
    %s50 = sadd.s32 %s49, 1
    %p53 = scmp.eq.s32.totalorder %s15, 1
    %p54 = scmp.ne.s32.totalorder %s49, %s51
    %p55 = scmp.eq.s32.totalorder %s15, 0
    %p56 = por %p54, %p55
    %p57 = scmp.ne.s32.totalorder %s49, %s51
    %p58 = scmp.eq.s32.totalorder %s20, 1
    %p59 = por %p57, %p58
    %p60 = scmp.ne.s32.totalorder %s51, %s52
    %p61 = scmp.eq.s32.totalorder %s20, 0
    %p62 = por %p60, %p61
    %p63 = scmp.ne.s32.totalorder %s51, %s52
    %p64 = scmp.eq.s32.totalorder %s21, 1
    %p65 = por %p63, %p64
    %p67 = scmp.ne.s32.totalorder %s52, %s66
    %p68 = scmp.eq.s32.totalorder %s21, 0
    %p69 = por %p67, %p68
    %s71 = sadd.s32 %s70, 1
    %p74 = scmp.eq.s32.totalorder %s15, 1
    %p75 = scmp.ne.s32.totalorder %s70, %s72
    %p76 = scmp.eq.s32.totalorder %s15, 0
    %p77 = por %p75, %p76
    %p78 = scmp.ne.s32.totalorder %s70, %s72
    %p79 = scmp.eq.s32.totalorder %s20, 1
    %p80 = por %p78, %p79
    %p81 = scmp.ne.s32.totalorder %s72, %s73
    %p82 = scmp.eq.s32.totalorder %s20, 0
    %p83 = por %p81, %p82
    %p84 = scmp.ne.s32.totalorder %s72, %s73
    %p85 = scmp.eq.s32.totalorder %s21, 1
    %p86 = por %p84, %p85
    %p88 = scmp.ne.s32.totalorder %s73, %s87
    %p89 = scmp.eq.s32.totalorder %s21, 0
    %p90 = por %p88, %p89
    %s92 = sadd.s32 %s91, 1
    %p95 = scmp.eq.s32.totalorder %s15, 1
    %p96 = scmp.ne.s32.totalorder %s91, %s93
    %p97 = scmp.eq.s32.totalorder %s15, 0
    %p98 = por %p96, %p97
    %p99 = scmp.ne.s32.totalorder %s91, %s93
    %p100 = scmp.eq.s32.totalorder %s20, 1
    %p101 = por %p99, %p100
    %p102 = scmp.ne.s32.totalorder %s93, %s94
    %p103 = scmp.eq.s32.totalorder %s20, 0
    %p104 = por %p102, %p103
    %p105 = scmp.ne.s32.totalorder %s93, %s94
    %p106 = scmp.eq.s32.totalorder %s21, 1
    %p107 = por %p105, %p106
    %p109 = scmp.ne.s32.totalorder %s94, %s108
    %p110 = scmp.eq.s32.totalorder %s21, 0
    %p111 = por %p109, %p110
    %s113 = sadd.s32 %s112, 1
    %p116 = scmp.eq.s32.totalorder %s15, 1
    %p117 = scmp.ne.s32.totalorder %s112, %s114
    %p118 = scmp.eq.s32.totalorder %s15, 0
    %p119 = por %p117, %p118
    %p120 = scmp.ne.s32.totalorder %s112, %s114
    %p121 = scmp.eq.s32.totalorder %s20, 1
    %p122 = por %p120, %p121
    %p123 = scmp.ne.s32.totalorder %s114, %s115
    %p124 = scmp.eq.s32.totalorder %s20, 0
    %p125 = por %p123, %p124
    %p126 = scmp.ne.s32.totalorder %s114, %s115
    %p127 = scmp.eq.s32.totalorder %s21, 1
    %p128 = por %p126, %p127
    %p130 = scmp.ne.s32.totalorder %s115, %s129
    %p131 = scmp.eq.s32.totalorder %s21, 0
    %p132 = por %p130, %p131
    %s134 = sadd.s32 %s133, 1
    %p137 = scmp.eq.s32.totalorder %s15, 1
    %p138 = scmp.ne.s32.totalorder %s133, %s135
    %p139 = scmp.eq.s32.totalorder %s15, 0
    %p140 = por %p138, %p139
    %p141 = scmp.ne.s32.totalorder %s133, %s135
    %p142 = scmp.eq.s32.totalorder %s20, 1
    %p143 = por %p141, %p142
    %p144 = scmp.ne.s32.totalorder %s135, %s136
    %p145 = scmp.eq.s32.totalorder %s20, 0
    %p146 = por %p144, %p145
    %p147 = scmp.ne.s32.totalorder %s135, %s136
    %p148 = scmp.eq.s32.totalorder %s21, 1
    %p149 = por %p147, %p148
    %p151 = scmp.ne.s32.totalorder %s136, %s150
    %p152 = scmp.eq.s32.totalorder %s21, 0
    %p153 = por %p151, %p152
    %s155 = sadd.s32 %s154, 1
    %p158 = scmp.eq.s32.totalorder %s15, 1
    %p159 = scmp.ne.s32.totalorder %s154, %s156
    %p160 = scmp.eq.s32.totalorder %s15, 0
    %p161 = por %p159, %p160
    %p162 = scmp.ne.s32.totalorder %s154, %s156
    %p163 = scmp.eq.s32.totalorder %s20, 1
    %p164 = por %p162, %p163
    %p165 = scmp.ne.s32.totalorder %s156, %s157
    %p166 = scmp.eq.s32.totalorder %s20, 0
    %p167 = por %p165, %p166
    %p168 = scmp.ne.s32.totalorder %s156, %s157
    %p169 = scmp.eq.s32.totalorder %s21, 1
    %p170 = por %p168, %p169
    %p172 = scmp.ne.s32.totalorder %s157, %s171
    %p173 = scmp.eq.s32.totalorder %s21, 0
    %p174 = por %p172, %p173
    %s175 = ssub.s32 %s15, %s22
    %p176 = scmp.eq.s32.totalorder %s175, 0
    %s178 = sadd.s32 %s177, 1
    %s179 = scalar_select %p176, %s177, %s178
    %p182 = pneg %p176
    %p183 = scmp.eq.s32.totalorder %s15, 1
    %p184 = por %p182, %p183
    %p185 = scmp.ne.s32.totalorder %s177, %s180
    %p186 = scmp.eq.s32.totalorder %s15, 0
    %p187 = por %p185, %p186
    %p188 = scmp.ne.s32.totalorder %s177, %s180
    %p189 = scmp.eq.s32.totalorder %s20, 1
    %p190 = por %p188, %p189
    %p191 = scmp.ne.s32.totalorder %s180, %s181
    %p192 = scmp.eq.s32.totalorder %s20, 0
    %p193 = por %p191, %p192
    %p194 = scmp.ne.s32.totalorder %s180, %s181
    %p195 = scmp.eq.s32.totalorder %s21, 1
    %p196 = por %p194, %p195
    %p198 = scmp.ne.s32.totalorder %s181, %s197
    %p199 = scmp.eq.s32.totalorder %s21, 0
    %p200 = por %p198, %p199
    %p201 = scmp.le.s32.totalorder 1, %s15
    %p202 = scmp.lt.s32.totalorder %s15, 3
    %p203 = pnand %p201, %p202
    %p204 = pneg %p203
    // Predicated region
    $region9: #{tpu_custom_call.1} parent=5 // pred_check
      _
    $region10: #{tpu_custom_call.1} parent=5 // pred_check_branch
      %206 = sbr.rel (%p203) target = $region12
    $region11: #{tpu_custom_call.1} parent=5 // pred_region
      %s207 = ssub.s32 %s15, 1
      // Predicated region
      $region13: #{tpu_custom_call.1} parent=11 // pred_check
        %p208 = pneg %p62
      $region14: #{tpu_custom_call.1} parent=11 // pred_check_branch
        %210 = sbr.rel (%p208) target = $region16
      $region15: #{tpu_custom_call.1} parent=11 // pred_region
        _
      $region16: #{tpu_custom_call.1} parent=11 // pred_fallthru
        _
      // Predicated region
      $region17: #{tpu_custom_call.1} parent=11 // pred_check
        %p211 = pneg %p83
      $region18: #{tpu_custom_call.1} parent=11 // pred_check_branch
        %213 = sbr.rel (%p211) target = $region20
      $region19: #{tpu_custom_call.1} parent=11 // pred_region
        _
      $region20: #{tpu_custom_call.1} parent=11 // pred_fallthru
        _
      // Predicated region
      $region21: #{tpu_custom_call.1} parent=11 // pred_check
        %p214 = pneg %p104
      $region22: #{tpu_custom_call.1} parent=11 // pred_check_branch
        %216 = sbr.rel (%p214) target = $region24
      $region23: #{tpu_custom_call.1} parent=11 // pred_region
        _
      $region24: #{tpu_custom_call.1} parent=11 // pred_fallthru
        _
      // Predicated region
      $region25: #{tpu_custom_call.1} parent=11 // pred_check
        %p217 = pneg %p125
      $region26: #{tpu_custom_call.1} parent=11 // pred_check_branch
        %219 = sbr.rel (%p217) target = $region28
      $region27: #{tpu_custom_call.1} parent=11 // pred_region
        _
      $region28: #{tpu_custom_call.1} parent=11 // pred_fallthru
        _
      // Predicated region
      $region29: #{tpu_custom_call.1} parent=11 // pred_check
        %p220 = pneg %p146
      $region30: #{tpu_custom_call.1} parent=11 // pred_check_branch
        %222 = sbr.rel (%p220) target = $region32
      $region31: #{tpu_custom_call.1} parent=11 // pred_region
        _
      $region32: #{tpu_custom_call.1} parent=11 // pred_fallthru
        _
      // Predicated region
      $region33: #{tpu_custom_call.1} parent=11 // pred_check
        %p223 = pneg %p167
      $region34: #{tpu_custom_call.1} parent=11 // pred_check_branch
        %225 = sbr.rel (%p223) target = $region36
      $region35: #{tpu_custom_call.1} parent=11 // pred_region
        _
      $region36: #{tpu_custom_call.1} parent=11 // pred_fallthru
        _
    $region12: #{tpu_custom_call.1} parent=5 // pred_fallthru
      _
    %p226 = scmp.lt.s32.totalorder %s15, 2
    // Predicated region
    $region37: #{tpu_custom_call.1} parent=5 // pred_check
      %p227 = pneg %p226
    $region38: #{tpu_custom_call.1} parent=5 // pred_check_branch
      %229 = sbr.rel (%p227) target = $region40
    $region39: #{tpu_custom_call.1} parent=5 // pred_region
      // Predicated region
      $region41: #{tpu_custom_call.1} parent=39 // pred_check
        %p230 = pneg %p35
      $region42: #{tpu_custom_call.1} parent=39 // pred_check_branch
        %232 = sbr.rel (%p230) target = $region44
      $region43: #{tpu_custom_call.1} parent=39 // pred_region
        %s233 = smul.u32 4, %s15
        %p234 = scmp.lt.s32.totalorder %s233, 7
        %s235 = scalar_select %p234, %s233, 7
        %s236 = smul.addr %s235, 8
        %s237 = scalar_lea.vmem %s0, %s236
        %s238 = smul.u32 4, %s15
      $region44: #{tpu_custom_call.1} parent=39 // pred_fallthru
        _
    $region40: #{tpu_custom_call.1} parent=5 // pred_fallthru
      _
    %p239 = scmp.le.s32.totalorder 1, %s15
    %p240 = scmp.lt.s32.totalorder %s15, 3
    %p241 = pnand %p239, %p240
    %p242 = pneg %p241
    // Predicated region
    $region45: #{tpu_custom_call.1} parent=5 // pred_check
      _
    $region46: #{tpu_custom_call.1} parent=5 // pred_check_branch
      %244 = sbr.rel (%p241) target = $region48
    $region47: #{tpu_custom_call.1} parent=5 // pred_region
      %s245 = ssub.s32 %s15, 1
      %s246 = smul.u32 4, %s20
      %p247 = scmp.lt.s32.totalorder %s246, 7
      %s248 = scalar_select %p247, %s246, 7
      %s249 = smul.addr %s248, 8
      %s250 = scalar_lea.vmem %s0, %s249
      %p251 = pneg %p41
      %p252 = pneg %p38
      %p253 = pneg %p62
      %p254 = pneg %p59
      %p255 = pneg %p83
      %p256 = pneg %p80
      %p257 = pneg %p104
      %p258 = pneg %p101
      %p259 = pneg %p125
      %p260 = pneg %p122
      %p261 = pneg %p146
      %p262 = pneg %p143
      %p263 = pneg %p167
      %p264 = pneg %p164
      %p265 = pneg %p193
      %p266 = pneg %p190
      %s267 = smul.u32 4, %s20
      %p268 = scmp.lt.s32.totalorder %s267, 7
      %s269 = scalar_select %p268, %s267, 7
      %s270 = smul.addr %s269, 8
      %s271 = scalar_lea.vmem %s7, %s270
      %s272 = smul.u32 4, %s20
      %p273 = scmp.lt.s32.totalorder %s272, 7
      %s274 = scalar_select %p273, %s272, 7
      %s275 = smul.addr %s274, 8
      %s276 = scalar_lea.vmem %s0, %s275
      %s277 = smul.u32 4, %s20
      %s278 = smul.u32 4, %s20
      %p279 = scmp.lt.s32.totalorder %s278, 7
      %s280 = scalar_select %p279, %s278, 7
      %s281 = smul.addr %s280, 8
      %s282 = scalar_lea.vmem %s7, %s281
      %s283 = smul.u32 4, %s20
      %v284 = vld [vmem:[%s1] sm:$0xff]
      %v285 = vld [vmem:[%s1 + $0x8] sm:$0xff]
      %v286 = vld [vmem:[%s276] sm:$0xff]
      %v287 = vld [vmem:[%s276 + $0x8] sm:$0xff]
      %v288 = vld [vmem:[%s276 + $0x10] sm:$0xff]
      %v289 = vld [vmem:[%s276 + $0x18] sm:$0xff]
      %v290 = vld [vmem:[%s2] sm:$0x1]
      %v292 = vperm.slane %v290, 0
      %vm294 = vcmask 130048
      %v296 = vsel %vm294, %v286, 0
      %v299 = vsel %vm294, %v287, 0
      %v302 = vsel %vm294, %v288, 0
      %v305 = vsel %vm294, %v289, 0
      %307 = vmatpush.msra.mxu0 0.0
      %308 = vmatpush.msra.mxu0 0.0
      %309 = vmatpush.msra.mxu0 0.0
      %310 = vmatpush.msra.mxu0 0.0
      %311 = vmatpush.msra.mxu0 0.0
      %312 = vmatpush.msra.mxu0 0.0
      %313 = vmatpush.msra.mxu0 0.0
      %314 = vmatpush.msra.mxu0 0.0
      %315 = vmatpush.msra.mxu0 0.0
      %316 = vmatpush.msra.mxu0 0.0
      %317 = vmatpush.msra.mxu0 0.0
      %318 = vmatpush.msra.mxu0 0.0
      %319 = vmatpush.msra.mxu0 0.0
      %320 = vmatpush.msra.mxu0 0.0
      %321 = vmatpush.msra.mxu0 %v285
      %322 = vmatpush.msra.mxu0 %v284
      %323 = vmatmul.f32.gmra.mxu0 %v296
      %v324 = vpop.f32.mrf.mxu0
      %v325 = vadd.f32 %v292, %v324
      %326 = vmatmul.f32.gmra.mxu0 %v299
      %v327 = vpop.f32.mrf.mxu0
      %v328 = vadd.f32 %v292, %v327
      %329 = vmatmul.f32.gmra.mxu0 %v302
      %v330 = vpop.f32.mrf.mxu0
      %v331 = vadd.f32 %v292, %v330
      %332 = vmatmul.f32.gmra.mxu0 %v305
      %v333 = vpop.f32.mrf.mxu0
      %v334 = vadd.f32 %v292, %v333
      %335 = vdwg.mxu0
      %v336 = vmax.f32 %v325, 0.0
      %v337 = vmax.f32 %v328, 0.0
      %v338 = vmax.f32 %v331, 0.0
      %v339 = vmax.f32 %v334, 0.0
      %v340 = vld [vmem:[%s3] sm:$0xff]
      %v341 = vld [vmem:[%s3 + $0x8] sm:$0xff]
      %v342 = vld [vmem:[%s3 + $0x10] sm:$0xff]
      %v343 = vld [vmem:[%s3 + $0x18] sm:$0xff]
      %v344 = vld [vmem:[%s4] sm:$0x1]
      %v346 = vperm.slane %v344, 0
      %vm348 = vcmask 261120
      %v350 = vsel %vm348, %v336, 0
      %v353 = vsel %vm348, %v337, 0
      %v356 = vsel %vm348, %v338, 0
      %v359 = vsel %vm348, %v339, 0
      %361 = vmatpush.msra.mxu0 0.0
      %362 = vmatpush.msra.mxu0 0.0
      %363 = vmatpush.msra.mxu0 0.0
      %364 = vmatpush.msra.mxu0 0.0
      %365 = vmatpush.msra.mxu0 0.0
      %366 = vmatpush.msra.mxu0 0.0
      %367 = vmatpush.msra.mxu0 0.0
      %368 = vmatpush.msra.mxu0 0.0
      %369 = vmatpush.msra.mxu0 0.0
      %370 = vmatpush.msra.mxu0 0.0
      %371 = vmatpush.msra.mxu0 0.0
      %372 = vmatpush.msra.mxu0 0.0
      %373 = vmatpush.msra.mxu0 %v343
      %374 = vmatpush.msra.mxu0 %v342
      %375 = vmatpush.msra.mxu0 %v341
      %376 = vmatpush.msra.mxu0 %v340
      %377 = vmatmul.f32.gmra.mxu0 %v350
      %v378 = vpop.f32.mrf.mxu0
      %v379 = vadd.f32 %v346, %v378
      %380 = vmatmul.f32.gmra.mxu0 %v353
      %v381 = vpop.f32.mrf.mxu0
      %v382 = vadd.f32 %v346, %v381
      %383 = vmatmul.f32.gmra.mxu0 %v356
      %v384 = vpop.f32.mrf.mxu0
      %v385 = vadd.f32 %v346, %v384
      %386 = vmatmul.f32.gmra.mxu0 %v359
      %v387 = vpop.f32.mrf.mxu0
      %v388 = vadd.f32 %v346, %v387
      %389 = vdwg.mxu0
      %v390 = vmax.f32 %v379, 0.0
      %v391 = vmax.f32 %v382, 0.0
      %v392 = vmax.f32 %v385, 0.0
      %v393 = vmax.f32 %v388, 0.0
      %v394 = vld [vmem:[%s5] sm:$0x1]
      %v396 = vperm.slane %v394, 0
      %v398 = vmul.f32 %v390, %v396
      %v399 = vmul.f32 %v391, %v396
      %v400 = vmul.f32 %v392, %v396
      %v401 = vmul.f32 %v393, %v396
      %v402 = vsel %vm348, %v398, 0.0
      %403 = vadd.xlane.f32.xlu0 %v402
      %v404 = vpop.xlane.xlu0 %403
      %v405 = vsel %vm348, %v399, 0.0
      %406 = vadd.xlane.f32.xlu0 %v405
      %v407 = vpop.xlane.xlu0 %406
      %v408 = vsel %vm348, %v400, 0.0
      %409 = vadd.xlane.f32.xlu0 %v408
      %v410 = vpop.xlane.xlu0 %409
      %v411 = vsel %vm348, %v401, 0.0
      %412 = vadd.xlane.f32.xlu0 %v411
      %v413 = vpop.xlane.xlu0 %412
      %v414 = vld [vmem:[#allocation2] sm:$0x1]
      %v416 = vperm.slane %v414, 0
      %v418 = vadd.f32 %v404, %v416
      %v419 = vadd.f32 %v407, %v416
      %v420 = vadd.f32 %v410, %v416
      %v421 = vadd.f32 %v413, %v416
      %vm422 = vcmask 7168
      %423 = vst.msk [vmem:[%s282] sm:$0xff] %vm422, %v418
      %424 = vst.msk [vmem:[%s282 + $0x8] sm:$0xff] %vm422, %v419
      %425 = vst.msk [vmem:[%s282 + $0x10] sm:$0xff] %vm422, %v420
      %426 = vst.msk [vmem:[%s282 + $0x18] sm:$0xff] %vm422, %v421
      %s427 = smul.u32 4, %s20
      %p428 = scmp.lt.s32.totalorder %s427, 7
      %s429 = scalar_select %p428, %s427, 7
      %s430 = smul.addr %s429, 8
      %s431 = scalar_lea.vmem %s7, %s430
      // Predicated region
      $region49: #{tpu_custom_call.1} parent=47 // pred_check
        %p432 = pneg %p190
      $region50: #{tpu_custom_call.1} parent=47 // pred_check_branch
        %434 = sbr.rel (%p432) target = $region52
      $region51: #{tpu_custom_call.1} parent=47 // pred_region
        %s435 = smul.u32 4, %s20
      $region52: #{tpu_custom_call.1} parent=47 // pred_fallthru
        _
    $region48: #{tpu_custom_call.1} parent=5 // pred_fallthru
      _
    %p436 = scmp.le.s32.totalorder 2, %s15
    // Predicated region
    $region53: #{tpu_custom_call.1} parent=5 // pred_check
      %p437 = pneg %p436
    $region54: #{tpu_custom_call.1} parent=5 // pred_check_branch
      %439 = sbr.rel (%p437) target = $region56
    $region55: #{tpu_custom_call.1} parent=5 // pred_region
      %s440 = ssub.s32 %s15, 2
      // Predicated region
      $region57: #{tpu_custom_call.1} parent=55 // pred_check
        %p441 = pneg %p196
      $region58: #{tpu_custom_call.1} parent=55 // pred_check_branch
        %443 = sbr.rel (%p441) target = $region60
      $region59: #{tpu_custom_call.1} parent=55 // pred_region
        %s444 = smul.u32 4, %s21
        %p445 = scmp.lt.s32.totalorder %s444, 7
        %s446 = scalar_select %p445, %s444, 7
        %s447 = smul.addr %s446, 8
        %s448 = scalar_lea.vmem %s7, %s447
      $region60: #{tpu_custom_call.1} parent=55 // pred_fallthru
        _
    $region56: #{tpu_custom_call.1} parent=5 // pred_fallthru
      _
  $region6: #{tpu_custom_call.1} parent=0 // loop_footer
    %s19 = sadd.s32 1, %s15
  $region7: #{tpu_custom_call.1} parent=0 // loop_footer_branch
    %14 = sbr.rel target = $region3
  $region8: #{tpu_custom_call.1} parent=0 // loop_exit
    _

</llo_original>
